<compile_context>
chip_gen: v5e
topology: v5e:2x2
jax: 0.10.0
libtpu: 0.0.40
codegen_flags: <defaults>
</compile_context>

<pallas_src>
import jax
import jax.numpy as jnp
from jax.experimental import pallas as pl
from jax.experimental.pallas import tpu as pltpu

NUM_INPUTS = 5
DIM = 64

# Padded / packed sizes (lane & sublane friendly).
NI_P = 8          # rows reserved for W1 in the slab (rows 5..7 are zero)
D_P = 128         # hidden dim padded to one full lane width
HEADS_P = 128     # fused head matmul width on the MXU (cols 0,1 live)
HEADS_OUT = 8     # HBM output width (lane-masked store, 16x less writeback)

# Row offsets inside the packed parameter slab (all 8-aligned).
W1_ROW = 0                      # rows [0, 8)    : W1      (NI_P, D_P)
B_ROW = W1_ROW + NI_P           # rows [8, 16)   : biases  (row 0=b1, 1=b2, 2=b_heads)
W2_ROW = B_ROW + 8              # rows [16, 144) : W2      (D_P, D_P)
WH_ROW = W2_ROW + D_P           # rows [144,272) : W_heads (D_P, HEADS_P)
SLAB_ROWS = WH_ROW + D_P        # 272 rows x 128 lanes


def _round_up(a, m):
    return ((a + m - 1) // m) * m


def _cdiv(a, m):
    return -(-a // m)


def brain_kernel(x_ref, slab_ref, out_ref):
    w_dtype = slab_ref.dtype
    x = x_ref[...].astype(w_dtype)                          # (TB, NUM_INPUTS)

    w1 = slab_ref[W1_ROW:W1_ROW + NUM_INPUTS, :]            # (5, D_P) live rows only
    b = slab_ref[B_ROW:B_ROW + 8, :].astype(jnp.float32)    # (8, D_P) bias block
    w2 = slab_ref[W2_ROW:W2_ROW + D_P, :]                   # (D_P, D_P)
    wh = slab_ref[WH_ROW:WH_ROW + D_P, :]                   # (D_P, HEADS_P)

    h1 = jnp.dot(x, w1, preferred_element_type=jnp.float32) + b[0:1, :]
    h1 = jnp.maximum(h1, 0.0)
    h2 = jnp.dot(h1.astype(w_dtype), w2,
                 preferred_element_type=jnp.float32) + b[1:2, :]
    h2 = jnp.maximum(h2, 0.0)                                # (TB, D_P) f32

    # Fused heads on the MXU at full lane width; write back only the live lanes
    # (col 0 = policy logit, col 1 = value; cols 2..7 are padding zeros).
    heads = jnp.dot(h2.astype(w_dtype), wh,
                    preferred_element_type=jnp.float32) + b[2:3, :]
    out_ref[...] = heads[:, :HEADS_OUT]


def pack_params(p, dtype=jnp.float32):
    """Pack torch-Linear-style params into one (SLAB_ROWS, 128) slab.

    p["w*"] have shape (in_features, out_features) (already transposed vs
    torch), p["b*"] have shape (1, out_features).  Use dtype=jnp.bfloat16 on
    v6e/v7x (halves the slab DMA); keep float32 on v5e.
    Padding lanes/rows are exact zeros so padded math matches unpadded math.
    """
    slab = jnp.zeros((SLAB_ROWS, D_P), jnp.float32)
    slab = slab.at[W1_ROW:W1_ROW + NUM_INPUTS, :DIM].set(p["w1"])
    slab = slab.at[B_ROW + 0, :DIM].set(p["b1"].reshape(-1))
    slab = slab.at[B_ROW + 1, :DIM].set(p["b2"].reshape(-1))
    slab = slab.at[B_ROW + 2, 0].set(p["bp"].reshape(()))
    slab = slab.at[B_ROW + 2, 1].set(p["bv"].reshape(()))
    slab = slab.at[W2_ROW:W2_ROW + DIM, :DIM].set(p["w2"])
    slab = slab.at[WH_ROW:WH_ROW + DIM, 0].set(p["wp"].reshape(-1))
    slab = slab.at[WH_ROW:WH_ROW + DIM, 1].set(p["wv"].reshape(-1))
    return slab.astype(dtype)


def brain_forward(x, slab, *, max_batch_tile=2048, min_parallel_tiles=2):
    """x: (B, NUM_INPUTS) f32, slab: packed params (f32 or bf16).

    Returns (policy_logit (B, 1), value (B, 1)), both float32.
    """
    B = x.shape[0]
    assert x.shape[1] == NUM_INPUTS

    # Batch tile: multiple of 8 sublanes, capped at max_batch_tile, and small
    # enough that large batches yield >= min_parallel_tiles grid steps so the
    # "parallel" axis can split across both v7x TensorCores.
    b_pad8 = _round_up(max(B, 1), 8)
    half = _round_up(_cdiv(b_pad8, min_parallel_tiles), 8)
    b_tile = max(8, min(max_batch_tile, half))
    n_tiles = _cdiv(B, b_tile)

    flops = 2 * n_tiles * b_tile * (NUM_INPUTS * D_P + D_P * D_P + D_P * HEADS_P)
    bytes_accessed = (x.size * x.dtype.itemsize
                      + slab.size * slab.dtype.itemsize
                      + B * HEADS_OUT * 4)

    out = pl.pallas_call(
        brain_kernel,
        out_shape=jax.ShapeDtypeStruct((B, HEADS_OUT), jnp.float32),
        grid=(n_tiles,),
        in_specs=[
            # Unpadded input: last dim (5) == full array dim -> legal block;
            # ragged final tile reads are clipped (row-independent math).
            pl.BlockSpec((b_tile, NUM_INPUTS), lambda i: (i, 0)),
            # Resident packed weight slab (constant index_map -> fetched once).
            pl.BlockSpec((SLAB_ROWS, D_P), lambda i: (0, 0)),
        ],
        out_specs=pl.BlockSpec((b_tile, HEADS_OUT), lambda i: (i, 0)),
        compiler_params=pltpu.CompilerParams(
            dimension_semantics=("parallel",)),
        cost_estimate=pl.CostEstimate(
            flops=flops, transcendentals=0, bytes_accessed=bytes_accessed),
    )(x, slab)

    policy_logit = out[:, 0:1]
    value = out[:, 1:2]
    return policy_logit, value


def init_params(key, num_inputs=NUM_INPUTS, dim=DIM):
    """PyTorch-style U(-1/sqrt(fan_in), 1/sqrt(fan_in)) init.

    Weights stored transposed vs torch.nn.Linear: shape (in, out).
    """
    def linear(k, fan_in, fan_out):
        kw, kb = jax.random.split(k)
        bound = 1.0 / jnp.sqrt(float(fan_in))
        w = jax.random.uniform(kw, (fan_in, fan_out), jnp.float32, -bound, bound)
        b = jax.random.uniform(kb, (1, fan_out), jnp.float32, -bound, bound)
        return w, b

    k1, k2, k3, k4 = jax.random.split(key, 4)
    w1, b1 = linear(k1, num_inputs, dim)
    w2, b2 = linear(k2, dim, dim)
    wp, bp = linear(k3, dim, 1)
    wv, bv = linear(k4, dim, 1)
    return {"w1": w1, "b1": b1, "w2": w2, "b2": b2,
            "wp": wp, "bp": bp, "wv": wv, "bv": bv}


def brain_forward_ref(x, p):
    """Pure-JAX reference for correctness check."""
    h = jnp.maximum(x @ p["w1"] + p["b1"], 0.0)
    h = jnp.maximum(h @ p["w2"] + p["b2"], 0.0)
    return h @ p["wp"] + p["bp"], h @ p["wv"] + p["bv"]


# TODO(synk): get_action_with_saliency (Bernoulli sampling + input-gradient
# saliency via autograd) is host/optimizer logic, not part of the fused
# forward kernel; it can be built on top with jax.grad of brain_forward_ref.


if __name__ == "__main__":
    key = jax.random.PRNGKey(0)
    k_params, k_x1, k_x2 = jax.random.split(key, 3)

    params = init_params(k_params)
    slab_f32 = pack_params(params)                 # f32 slab (v5e / baseline)

    # Per-step inference shape (B=2).
    batch = 2
    x = jax.random.normal(k_x1, (batch, NUM_INPUTS), jnp.float32)
    policy_logit, value = brain_forward(x, slab_f32)
    jax.block_until_ready((policy_logit, value))

    ref_policy, ref_value = brain_forward_ref(x, params)
    assert policy_logit.shape == (batch, 1) and value.shape == (batch, 1)
    assert jnp.allclose(policy_logit, ref_policy, atol=1e-5, rtol=1e-5)
    assert jnp.allclose(value, ref_value, atol=1e-5, rtol=1e-5)

    # Ragged batch: exercises the clipped edge tile and the >=2-tile grid.
    batch2 = 20
    x2 = jax.random.normal(k_x2, (batch2, NUM_INPUTS), jnp.float32)
    p2, v2 = brain_forward(x2, slab_f32)
    jax.block_until_ready((p2, v2))
    rp2, rv2 = brain_forward_ref(x2, params)
    assert p2.shape == (batch2, 1) and v2.shape == (batch2, 1)
    assert jnp.allclose(p2, rp2, atol=1e-5, rtol=1e-5)
    assert jnp.allclose(v2, rv2, atol=1e-5, rtol=1e-5)

    # bf16 weight slab (v6e/v7x path): half the slab DMA, f32 accumulation.
    slab_bf16 = pack_params(params, dtype=jnp.bfloat16)
    p3, v3 = brain_forward(x2, slab_bf16)
    jax.block_until_ready((p3, v3))
    assert jnp.allclose(p3, rp2, atol=5e-2, rtol=5e-2)
    assert jnp.allclose(v3, rv2, atol=5e-2, rtol=5e-2)

    print("KERNEL_OK")
</pallas_src>

<mosaic_0001>
module attributes {stable_mosaic.version = 11 : i64} {
  func.func @brain_kernel(%arg0: i32, %arg1: memref<8x5xf32, #tpu.memory_space<vmem>>, %arg2: memref<272x128xf32, #tpu.memory_space<vmem>>, %arg3: memref<8x8xf32, #tpu.memory_space<vmem>>) attributes {dimension_semantics = [#tpu.dimension_semantics<parallel>], iteration_bounds = array<i64: 1>, scalar_prefetch = 0 : i64, scratch_operands = 0 : i64, tpu.core_type = #tpu.core_type<tc>, window_params = [{transform_indices = @transform_0, window_bounds = array<i64: 8, 5>}, {pipeline_mode = #tpu.pipeline_mode<synchronous>, transform_indices = @transform_1, window_bounds = array<i64: 272, 128>}, {transform_indices = @transform_2, window_bounds = array<i64: 8, 8>}]} {
    %c0 = arith.constant 0 : index
    %c0_0 = arith.constant 0 : index
    %0 = vector.load %arg1[%c0, %c0_0] : memref<8x5xf32, #tpu.memory_space<vmem>>, vector<8x5xf32>
    %c0_1 = arith.constant 0 : index
    %c0_2 = arith.constant 0 : index
    %1 = vector.load %arg2[%c0_1, %c0_2] : memref<272x128xf32, #tpu.memory_space<vmem>>, vector<5x128xf32>
    %c8 = arith.constant 8 : index
    %c0_3 = arith.constant 0 : index
    %2 = vector.load %arg2[%c8, %c0_3] : memref<272x128xf32, #tpu.memory_space<vmem>>, vector<8x128xf32>
    %c16 = arith.constant 16 : index
    %c0_4 = arith.constant 0 : index
    %3 = vector.load %arg2[%c16, %c0_4] : memref<272x128xf32, #tpu.memory_space<vmem>>, vector<128x128xf32>
    %c144 = arith.constant 144 : index
    %c0_5 = arith.constant 0 : index
    %4 = vector.load %arg2[%c144, %c0_5] : memref<272x128xf32, #tpu.memory_space<vmem>>, vector<128x128xf32>
    %cst = arith.constant dense<0.000000e+00> : vector<8x128xf32>
    %5 = tpu.matmul %0, %1, %cst {dimension_numbers = #tpu.dot_dimension_numbers<[1], [0], [0], [1], [0, 0, 1, 1], [], []>} : vector<8x5xf32>, vector<5x128xf32>, vector<8x128xf32> -> vector<8x128xf32>
    %6 = vector.extract_strided_slice %2 {offsets = [0, 0], sizes = [1, 128], strides = [1, 1]} : vector<8x128xf32> to vector<1x128xf32>
    %7 = vector.broadcast %6 : vector<1x128xf32> to vector<8x128xf32>
    %8 = arith.addf %5, %7 : vector<8x128xf32>
    %cst_6 = arith.constant 0.000000e+00 : f32
    %9 = vector.broadcast %cst_6 : f32 to vector<8x128xf32>
    %10 = arith.maximumf %8, %9 : vector<8x128xf32>
    %cst_7 = arith.constant dense<0.000000e+00> : vector<8x128xf32>
    %11 = tpu.matmul %10, %3, %cst_7 {dimension_numbers = #tpu.dot_dimension_numbers<[1], [0], [0], [1], [0, 0, 1, 1], [], []>} : vector<8x128xf32>, vector<128x128xf32>, vector<8x128xf32> -> vector<8x128xf32>
    %12 = vector.extract_strided_slice %2 {offsets = [1, 0], sizes = [1, 128], strides = [1, 1]} : vector<8x128xf32> to vector<1x128xf32>
    %13 = vector.broadcast %12 : vector<1x128xf32> to vector<8x128xf32>
    %14 = arith.addf %11, %13 : vector<8x128xf32>
    %cst_8 = arith.constant 0.000000e+00 : f32
    %15 = vector.broadcast %cst_8 : f32 to vector<8x128xf32>
    %16 = arith.maximumf %14, %15 : vector<8x128xf32>
    %cst_9 = arith.constant dense<0.000000e+00> : vector<8x128xf32>
    %17 = tpu.matmul %16, %4, %cst_9 {dimension_numbers = #tpu.dot_dimension_numbers<[1], [0], [0], [1], [0, 0, 1, 1], [], []>} : vector<8x128xf32>, vector<128x128xf32>, vector<8x128xf32> -> vector<8x128xf32>
    %18 = vector.extract_strided_slice %2 {offsets = [2, 0], sizes = [1, 128], strides = [1, 1]} : vector<8x128xf32> to vector<1x128xf32>
    %19 = vector.broadcast %18 : vector<1x128xf32> to vector<8x128xf32>
    %20 = arith.addf %17, %19 : vector<8x128xf32>
    %21 = vector.extract_strided_slice %20 {offsets = [0, 0], sizes = [8, 8], strides = [1, 1]} : vector<8x128xf32> to vector<8x8xf32>
    %c0_10 = arith.constant 0 : index
    %c0_11 = arith.constant 0 : index
    %22 = vector.load %arg3[%c0_10, %c0_11] : memref<8x8xf32, #tpu.memory_space<vmem>>, vector<8x8xf32>
    tpu.vector_store %arg3[%c0_10, %c0_11], %21 {strides = array<i32>} : memref<8x8xf32, #tpu.memory_space<vmem>>, vector<8x8xf32>,
    return
  }
  func.func @transform_0(%arg0: i32) -> (i32, i32) {
    %c0_i32 = arith.constant 0 : i32
    %c0_i32_0 = arith.constant 0 : i32
    return %arg0, %c0_i32 : i32, i32
  }
  func.func @transform_1(%arg0: i32) -> (i32, i32) {
    %c0_i32 = arith.constant 0 : i32
    %c0_i32_0 = arith.constant 0 : i32
    %c0_i32_1 = arith.constant 0 : i32
    return %c0_i32, %c0_i32_0 : i32, i32
  }
  func.func @transform_2(%arg0: i32) -> (i32, i32) {
    %c0_i32 = arith.constant 0 : i32
    %c0_i32_0 = arith.constant 0 : i32
    return %arg0, %c0_i32 : i32, i32
  }
}

</mosaic_0001>

<llo_original>
// kernel: tpu_custom_call.1
$region0: #{tpu_custom_call.1}
  #allocation0 [shape = 'u32[]', space=smem, size = 0x4, offset = 0x4, fixed_abs, tag = 'smem constant byte address 0x4 - core index']
  #allocation1 [shape = 'u32[72,128]{1,0:T(1,128)}', space=vmem, size = 0x9000, scoped, tag = 'internal scratch']
  %s0 = inlined_call_operand.hbm [shape: f32[2,5], index: 0, kind: input, shape index: {}]
  %s1 = inlined_call_operand.hbm [shape: f32[272,128], index: 1, kind: input, shape index: {}]
  %s2 = inlined_call_operand.hbm [shape: f32[2,8], index: 2, kind: output, shape index: {}]
  %s3 = sld [smem:[#allocation0]]
  $region26: #{tpu_custom_call.1} parent=0
    _
  %s5 = ssub.s32 1, %s3
  %s6 = scalar_select 0, %s5, %s3
  $region1: #{tpu_custom_call.1} parent=0
    #allocation2 [shape = 'u8[4096]{0}', space=vmem, size = 0x1000, scoped, tag = 'input window, operand 0, single buffered']
    #allocation3 [shape = 's32[1]{0}', space=sflag, size = 0x4, scoped, tag = 'scoped memory for tpu_custom_call.1']
    #allocation4 [shape = 's32[1]{0}', space=sflag, size = 0x4, scoped, tag = 'scoped memory for tpu_custom_call.1']
    #allocation5 [shape = 'u8[139264]{0}', space=vmem, size = 0x22000, scoped, tag = 'input window, operand 1, single buffered']
    #allocation6 [shape = 's32[1]{0}', space=sflag, size = 0x4, scoped, tag = 'scoped memory for tpu_custom_call.1']
    #allocation7 [shape = 'u8[4096]{0}', space=vmem, size = 0x1000, scoped, tag = 'output window, operand 0, single buffered']
    %7 = vsyncpa [#allocation3], 0
    %8 = vsyncpa [#allocation6], 0
    %9 = vsyncpa [#allocation4], 0
    // Predicated region
    $region2: #{tpu_custom_call.1} parent=1 // pred_check
      _
    $region3: #{tpu_custom_call.1} parent=1 // pred_check_branch
      %11 = sbr.rel (0) target = $region5
    $region4: #{tpu_custom_call.1} parent=1 // pred_region
      %13 = vsyncadd [#allocation3], 96
      %s14 = sshll.u32 %s0, 4
      %s15 = int_to_ptr.hbm [resolvable:$true] %s14
      %s16 = sshll.u32 [#allocation2], 4
      %s17 = int_to_ptr.vmem [resolvable:$true] %s16
      %22 = dma.hbm_to_vmem [thread:$0]  %s15, 32, %s17, [#allocation3], 32, 32, 2
    $region5: #{tpu_custom_call.1} parent=1 // pred_fallthru
      _
    // Predicated region
    $region6: #{tpu_custom_call.1} parent=1 // pred_check
      _
    $region7: #{tpu_custom_call.1} parent=1 // pred_check_branch
      %24 = sbr.rel (0) target = $region9
    $region8: #{tpu_custom_call.1} parent=1 // pred_region
      %26 = vsyncadd [#allocation6], 0
      %s27 = sshll.u32 %s1, 4
      %s28 = int_to_ptr.hbm [resolvable:$true] %s27
      %s29 = sshll.u32 [#allocation5], 4
      %s30 = int_to_ptr.vmem [resolvable:$true] %s29
      %35 = dma.hbm_to_vmem [thread:$0]  %s28, 4352, %s30, [#allocation6], 128, 128, 8
    $region9: #{tpu_custom_call.1} parent=1 // pred_fallthru
      _
    // Predicated region
    $region10: #{tpu_custom_call.1} parent=1 // pred_check
      _
    $region11: #{tpu_custom_call.1} parent=1 // pred_check_branch
      %37 = sbr.rel (0) target = $region13
    $region12: #{tpu_custom_call.1} parent=1 // pred_region
      %39 = dma.done [#allocation3], 128
    $region13: #{tpu_custom_call.1} parent=1 // pred_fallthru
      _
    // Predicated region
    $region14: #{tpu_custom_call.1} parent=1 // pred_check
      _
    $region15: #{tpu_custom_call.1} parent=1 // pred_check_branch
      %41 = sbr.rel (0) target = $region17
    $region16: #{tpu_custom_call.1} parent=1 // pred_region
      %43 = dma.done [#allocation6], 4352
    $region17: #{tpu_custom_call.1} parent=1 // pred_fallthru
      _
    %v44 = vld [vmem:[#allocation2] sm:$0xff]
    %v45 = vld [vmem:[#allocation5] sm:$0x1f]
    %v46 = vld [vmem:[#allocation5 + $0x8] sm:$0xff]
    %v47 = vld [vmem:[#allocation5 + $0x10] sm:$0xff]
    %v48 = vld [vmem:[#allocation5 + $0x18] sm:$0xff]
    %v49 = vld [vmem:[#allocation5 + $0x20] sm:$0xff]
    %v50 = vld [vmem:[#allocation5 + $0x28] sm:$0xff]
    %v51 = vld [vmem:[#allocation5 + $0x30] sm:$0xff]
    %v52 = vld [vmem:[#allocation5 + $0x38] sm:$0xff]
    %v53 = vld [vmem:[#allocation5 + $0x40] sm:$0xff]
    %v54 = vld [vmem:[#allocation5 + $0x48] sm:$0xff]
    %v55 = vld [vmem:[#allocation5 + $0x50] sm:$0xff]
    %v56 = vld [vmem:[#allocation5 + $0x58] sm:$0xff]
    %v57 = vld [vmem:[#allocation5 + $0x60] sm:$0xff]
    %v58 = vld [vmem:[#allocation5 + $0x68] sm:$0xff]
    %v59 = vld [vmem:[#allocation5 + $0x70] sm:$0xff]
    %v60 = vld [vmem:[#allocation5 + $0x78] sm:$0xff]
    %v61 = vld [vmem:[#allocation5 + $0x80] sm:$0xff]
    %v62 = vld [vmem:[#allocation5 + $0x88] sm:$0xff]
    %v63 = vld [vmem:[#allocation5 + $0x90] sm:$0xff]
    %v64 = vld [vmem:[#allocation5 + $0x98] sm:$0xff]
    %v65 = vld [vmem:[#allocation5 + $0xa0] sm:$0xff]
    %v66 = vld [vmem:[#allocation5 + $0xa8] sm:$0xff]
    %v67 = vld [vmem:[#allocation5 + $0xb0] sm:$0xff]
    %v68 = vld [vmem:[#allocation5 + $0xb8] sm:$0xff]
    %v69 = vld [vmem:[#allocation5 + $0xc0] sm:$0xff]
    %v70 = vld [vmem:[#allocation5 + $0xc8] sm:$0xff]
    %v71 = vld [vmem:[#allocation5 + $0xd0] sm:$0xff]
    %v72 = vld [vmem:[#allocation5 + $0xd8] sm:$0xff]
    %v73 = vld [vmem:[#allocation5 + $0xe0] sm:$0xff]
    %v74 = vld [vmem:[#allocation5 + $0xe8] sm:$0xff]
    %v75 = vld [vmem:[#allocation5 + $0xf0] sm:$0xff]
    %v76 = vld [vmem:[#allocation5 + $0xf8] sm:$0xff]
    %v77 = vld [vmem:[#allocation5 + $0x100] sm:$0xff]
    %v78 = vld [vmem:[#allocation5 + $0x108] sm:$0xff]
    %v79 = vperm.slane %v46, 0
    %vm80 = vcmask 39936
    %v82 = vsel %vm80, %v44, 0
    %vm84 = vcmask 1044480
    %v86 = vsel %vm84, %v45, 0
    %88 = vmatpush.msra.mxu0 0.0
    %89 = vmatpush.msra.mxu0 0.0
    %90 = vmatpush.msra.mxu0 0.0
    %91 = vmatpush.msra.mxu0 0.0
    %92 = vmatpush.msra.mxu0 0.0
    %93 = vmatpush.msra.mxu0 0.0
    %94 = vmatpush.msra.mxu0 0.0
    %95 = vmatpush.msra.mxu0 0.0
    %96 = vmatpush.msra.mxu0 0.0
    %97 = vmatpush.msra.mxu0 0.0
    %98 = vmatpush.msra.mxu0 0.0
    %99 = vmatpush.msra.mxu0 0.0
    %100 = vmatpush.msra.mxu0 0.0
    %101 = vmatpush.msra.mxu0 0.0
    %102 = vmatpush.msra.mxu0 0.0
    %103 = vmatpush.msra.mxu0 %v86
    %104 = vmatmul.f32.gmra.mxu0 %v82
    %v105 = vpop.f32.mrf.mxu0
    %v106 = vadd.f32 %v79, %v105
    %107 = vdwg.mxu0
    %v108 = vmax.f32 %v106, 0.0
    %v109 = vperm.slane %v46, 1
    %110 = vmatpush.msra.mxu0 %v62
    %111 = vmatpush.msra.mxu0 %v61
    %112 = vmatpush.msra.mxu0 %v60
    %113 = vmatpush.msra.mxu0 %v59
    %114 = vmatpush.msra.mxu0 %v58
    %115 = vmatpush.msra.mxu0 %v57
    %116 = vmatpush.msra.mxu0 %v56
    %117 = vmatpush.msra.mxu0 %v55
    %118 = vmatpush.msra.mxu0 %v54
    %119 = vmatpush.msra.mxu0 %v53
    %120 = vmatpush.msra.mxu0 %v52
    %121 = vmatpush.msra.mxu0 %v51
    %122 = vmatpush.msra.mxu0 %v50
    %123 = vmatpush.msra.mxu0 %v49
    %124 = vmatpush.msra.mxu0 %v48
    %125 = vmatpush.msra.mxu0 %v47
    %126 = vmatmul.f32.gmra.mxu0 %v108
    %v127 = vpop.f32.mrf.mxu0
    %v128 = vadd.f32 %v109, %v127
    %129 = vdwg.mxu0
    %v130 = vmax.f32 %v128, 0.0
    %v131 = vperm.slane %v46, 2
    %132 = vmatpush.msra.mxu0 %v78
    %133 = vmatpush.msra.mxu0 %v77
    %134 = vmatpush.msra.mxu0 %v76
    %135 = vmatpush.msra.mxu0 %v75
    %136 = vmatpush.msra.mxu0 %v74
    %137 = vmatpush.msra.mxu0 %v73
    %138 = vmatpush.msra.mxu0 %v72
    %139 = vmatpush.msra.mxu0 %v71
    %140 = vmatpush.msra.mxu0 %v70
    %141 = vmatpush.msra.mxu0 %v69
    %142 = vmatpush.msra.mxu0 %v68
    %143 = vmatpush.msra.mxu0 %v67
    %144 = vmatpush.msra.mxu0 %v66
    %145 = vmatpush.msra.mxu0 %v65
    %146 = vmatpush.msra.mxu0 %v64
    %147 = vmatpush.msra.mxu0 %v63
    %148 = vmatmul.f32.gmra.mxu0 %v130
    %v149 = vpop.f32.mrf.mxu0
    %v150 = vadd.f32 %v131, %v149
    %151 = vdwg.mxu0
    %vm152 = vcmask 64512
    %153 = vst.msk [vmem:[#allocation7] sm:$0xff] %vm152, %v150
    // Predicated region
    $region18: #{tpu_custom_call.1} parent=1 // pred_check
      _
    $region19: #{tpu_custom_call.1} parent=1 // pred_check_branch
      %155 = sbr.rel (0) target = $region21
    $region20: #{tpu_custom_call.1} parent=1 // pred_region
      %157 = vsyncadd [#allocation4], 96
      %s158 = sshll.u32 [#allocation7], 4
      %s159 = int_to_ptr.vmem [resolvable:$true] %s158
      %s160 = sshll.u32 %s2, 4
      %s161 = int_to_ptr.hbm [resolvable:$true] %s160
      %166 = dma.vmem_to_hbm [thread:$0]  %s159, 32, %s161, [#allocation4], 32, 32, 2
    $region21: #{tpu_custom_call.1} parent=1 // pred_fallthru
      _
    // Predicated region
    $region22: #{tpu_custom_call.1} parent=1 // pred_check
      _
    $region23: #{tpu_custom_call.1} parent=1 // pred_check_branch
      %168 = sbr.rel (0) target = $region25
    $region24: #{tpu_custom_call.1} parent=1 // pred_region
      %170 = dma.done [#allocation4], 128
    $region25: #{tpu_custom_call.1} parent=1 // pred_fallthru
      _
    %171 = vsyncpa [#allocation3], 1
    %172 = vsyncpa [#allocation6], 1
    %173 = vsyncpa [#allocation4], 1

</llo_original>
